<compile_context>
chip_gen: v7x
topology: tpu7x:2x2x1
jax: 0.10.0
libtpu: 0.0.40
codegen_flags: <defaults>
</compile_context>

<pallas_src>
import jax
import jax.numpy as jnp
from jax.experimental import pallas as pl
from jax.experimental.pallas import tpu as pltpu


def policy_net_kernel(x_ref, w1_ref, b1_ref, w2_ref, b2_ref, o_ref):
    """Lane-dense PolicyNet forward on one batch tile.

    x_ref  : (S, Bt)  f32  states, batch on the lane axis
    w1_ref : (H, S)   f32  fc1 weight (PyTorch (out, in) layout)
    b1_ref : (H, 1)   f32
    w2_ref : (A, H)   f32  fc2 weight
    b2_ref : (A, 1)   f32
    o_ref  : (A, Bt)  f32  softmax probabilities, batch on the lane axis
    """
    x = x_ref[...]
    w1 = w1_ref[...]
    w2 = w2_ref[...]
    S = x_ref.shape[0]
    H = w1_ref.shape[0]

    # fc1 + ReLU as S broadcast-FMAs on the VPU: (H,1)*(1,Bt) outer-product terms.
    h = w1[:, 0:1] * x[0:1, :]
    for s in range(1, S):
        h = h + w1[:, s:s + 1] * x[s:s + 1, :]
    h = jnp.maximum(h + b1_ref[...], 0.0)                      # (H, Bt)

    # fc2 as H broadcast-FMAs: (A,1)*(1,Bt) terms.
    logits = w2[:, 0:1] * h[0:1, :]
    for k in range(1, H):
        logits = logits + w2[:, k:k + 1] * h[k:k + 1, :]
    logits = logits + b2_ref[...]                               # (A, Bt)

    # Numerically-stable softmax over the action (sublane) axis.  Exact divide so
    # downstream TRPO ratios / KL terms see full f32-accurate probabilities.
    m = jnp.max(logits, axis=0, keepdims=True)
    e = jnp.exp(logits - m)
    denom = jnp.sum(e, axis=0, keepdims=True)
    o_ref[...] = (e / denom).astype(o_ref.dtype)


def _round_up(v, m):
    return ((v + m - 1) // m) * m


def policy_net_forward(x, w1, b1, w2, b2, *, block_b=32768, gridless_max_b=1024):
    """PolicyNet forward.  x: (B, state_dim) f32; weights in PyTorch layout:
    w1 (hidden, state), b1 (hidden,), w2 (action, hidden), b2 (action,).
    Returns (B, action_dim) f32 action probabilities (softmax over dim=1)."""
    B, S = x.shape
    H, S_w = w1.shape
    A, H_w = w2.shape
    assert S_w == S and H_w == H

    # Lane-dense operands: batch on the 128-lane axis everywhere.
    x_t = x.T                      # (S, B)
    b1_c = b1.reshape(H, 1)
    b2_c = b2.reshape(A, 1)

    cost = pl.CostEstimate(
        flops=2 * B * (S * H + H * A),
        transcendentals=B * A,
        bytes_accessed=4 * (B * S + H * S + H + A * H + A + B * A),
    )

    if B <= gridless_max_b:
        # Tiny RL-style batches: one gridless call, everything VMEM resident,
        # no pipeline prolog/epilog or index-map bookkeeping.
        out_t = pl.pallas_call(
            policy_net_kernel,
            out_shape=jax.ShapeDtypeStruct((A, B), jnp.float32),
            in_specs=[pl.BlockSpec(memory_space=pltpu.MemorySpace.VMEM)] * 5,
            out_specs=pl.BlockSpec(memory_space=pltpu.MemorySpace.VMEM),
            cost_estimate=cost,
        )(x_t, w1, b1_c, w2, b2_c)
        return out_t.T

    # Large batch: tile the lane (batch) axis only; weights/biases stay VMEM-resident
    # across all grid steps.  Clamp the tile so there are always >= 2 grid steps
    # (keeps v7x's second TensorCore busy via the "parallel" axis).
    assert block_b % 128 == 0, "block_b must be a multiple of 128 (lane width)"
    bb = min(block_b, _round_up(pl.cdiv(B, 2), 128))
    num_tiles = pl.cdiv(B, bb)     # ragged final tile: Pallas masks OOB stores

    out_t = pl.pallas_call(
        policy_net_kernel,
        out_shape=jax.ShapeDtypeStruct((A, B), jnp.float32),
        grid=(num_tiles,),
        in_specs=[
            pl.BlockSpec((S, bb), lambda i: (0, i)),   # x^T : tiled over batch lanes
            pl.BlockSpec((H, S), lambda i: (0, 0)),    # w1  : resident
            pl.BlockSpec((H, 1), lambda i: (0, 0)),    # b1  : resident
            pl.BlockSpec((A, H), lambda i: (0, 0)),    # w2  : resident
            pl.BlockSpec((A, 1), lambda i: (0, 0)),    # b2  : resident
        ],
        out_specs=pl.BlockSpec((A, bb), lambda i: (0, i)),
        compiler_params=pltpu.CompilerParams(
            dimension_semantics=("parallel",),         # v7x: shard batch over 2 TCs
        ),
        cost_estimate=cost,
    )(x_t, w1, b1_c, w2, b2_c)
    return out_t.T


def init_params(key, state_dim, hidden_dim, action_dim):
    """PyTorch Linear default init U(-1/sqrt(fan_in), 1/sqrt(fan_in)), (out, in) layout."""
    k1, k2, k3, k4 = jax.random.split(key, 4)
    lim1 = 1.0 / jnp.sqrt(jnp.float32(state_dim))
    lim2 = 1.0 / jnp.sqrt(jnp.float32(hidden_dim))
    w1 = jax.random.uniform(k1, (hidden_dim, state_dim), jnp.float32, -lim1, lim1)
    b1 = jax.random.uniform(k2, (hidden_dim,), jnp.float32, -lim1, lim1)
    w2 = jax.random.uniform(k3, (action_dim, hidden_dim), jnp.float32, -lim2, lim2)
    b2 = jax.random.uniform(k4, (action_dim,), jnp.float32, -lim2, lim2)
    return w1, b1, w2, b2


def reference_forward(x, w1, b1, w2, b2):
    hp = jax.lax.Precision.HIGHEST
    h = jnp.maximum(jnp.dot(x, w1.T, precision=hp) + b1, 0.0)
    logits = jnp.dot(h, w2.T, precision=hp) + b2
    return jax.nn.softmax(logits, axis=1)


if __name__ == "__main__":
    # Small shapes consistent with the module (CartPole-ish dims)
    batch, state_dim, hidden_dim, action_dim = 2, 4, 32, 4

    key = jax.random.PRNGKey(0)
    kx, kp, kx2 = jax.random.split(key, 3)
    x = jax.random.normal(kx, (batch, state_dim), dtype=jnp.float32)
    w1, b1, w2, b2 = init_params(kp, state_dim, hidden_dim, action_dim)

    # --- small-batch (gridless) path ---
    out = jax.block_until_ready(policy_net_forward(x, w1, b1, w2, b2))
    ref = reference_forward(x, w1, b1, w2, b2)
    assert out.shape == (batch, action_dim)
    assert jnp.allclose(out, ref, atol=1e-4, rtol=1e-4), "small-batch mismatch vs reference"
    assert jnp.allclose(jnp.sum(out, axis=1), 1.0, atol=1e-5), "small-batch probs don't sum to 1"

    # --- batch-tiled path: grid over lane-dense batch tiles, resident weights,
    #     ragged final tile (no wrapper pad/slice), exact softmax ---
    big_b = 3000                                   # deliberately not a tile multiple
    x_big = jax.random.normal(kx2, (big_b, state_dim), dtype=jnp.float32)
    out_big = jax.block_until_ready(
        policy_net_forward(x_big, w1, b1, w2, b2, block_b=1024, gridless_max_b=256))
    ref_big = reference_forward(x_big, w1, b1, w2, b2)
    assert out_big.shape == (big_b, action_dim)
    assert jnp.allclose(out_big, ref_big, atol=1e-4, rtol=1e-4), "tiled mismatch vs reference"
    assert jnp.allclose(jnp.sum(out_big, axis=1), 1.0, atol=1e-5), "tiled probs don't sum to 1"

    print("KERNEL_OK")
</pallas_src>

<mosaic_0001>
module attributes {stable_mosaic.version = 11 : i64} {
  func.func @policy_net_kernel(%arg0: memref<4x2xf32, #tpu.memory_space<vmem>>, %arg1: memref<32x4xf32, #tpu.memory_space<vmem>>, %arg2: memref<32x1xf32, #tpu.memory_space<vmem>>, %arg3: memref<4x32xf32, #tpu.memory_space<vmem>>, %arg4: memref<4x1xf32, #tpu.memory_space<vmem>>, %arg5: memref<4x2xf32, #tpu.memory_space<vmem>>) attributes {dimension_semantics = [], scalar_prefetch = 0 : i64, scratch_operands = 0 : i64, tpu.core_type = #tpu.core_type<tc>} {
    %c0 = arith.constant 0 : index
    %c0_0 = arith.constant 0 : index
    %0 = vector.load %arg0[%c0, %c0_0] : memref<4x2xf32, #tpu.memory_space<vmem>>, vector<4x2xf32>
    %c0_1 = arith.constant 0 : index
    %c0_2 = arith.constant 0 : index
    %1 = vector.load %arg1[%c0_1, %c0_2] : memref<32x4xf32, #tpu.memory_space<vmem>>, vector<32x4xf32>
    %c0_3 = arith.constant 0 : index
    %c0_4 = arith.constant 0 : index
    %2 = vector.load %arg3[%c0_3, %c0_4] : memref<4x32xf32, #tpu.memory_space<vmem>>, vector<4x32xf32>
    %3 = vector.extract_strided_slice %1 {offsets = [0, 0], sizes = [32, 1], strides = [1, 1]} : vector<32x4xf32> to vector<32x1xf32>
    %4 = vector.extract_strided_slice %0 {offsets = [0, 0], sizes = [1, 2], strides = [1, 1]} : vector<4x2xf32> to vector<1x2xf32>
    %5 = vector.broadcast %3 : vector<32x1xf32> to vector<32x2xf32>
    %6 = vector.broadcast %4 : vector<1x2xf32> to vector<32x2xf32>
    %7 = arith.mulf %5, %6 : vector<32x2xf32>
    %8 = vector.extract_strided_slice %1 {offsets = [0, 1], sizes = [32, 1], strides = [1, 1]} : vector<32x4xf32> to vector<32x1xf32>
    %9 = vector.extract_strided_slice %0 {offsets = [1, 0], sizes = [1, 2], strides = [1, 1]} : vector<4x2xf32> to vector<1x2xf32>
    %10 = vector.broadcast %8 : vector<32x1xf32> to vector<32x2xf32>
    %11 = vector.broadcast %9 : vector<1x2xf32> to vector<32x2xf32>
    %12 = arith.mulf %10, %11 : vector<32x2xf32>
    %13 = arith.addf %7, %12 : vector<32x2xf32>
    %14 = vector.extract_strided_slice %1 {offsets = [0, 2], sizes = [32, 1], strides = [1, 1]} : vector<32x4xf32> to vector<32x1xf32>
    %15 = vector.extract_strided_slice %0 {offsets = [2, 0], sizes = [1, 2], strides = [1, 1]} : vector<4x2xf32> to vector<1x2xf32>
    %16 = vector.broadcast %14 : vector<32x1xf32> to vector<32x2xf32>
    %17 = vector.broadcast %15 : vector<1x2xf32> to vector<32x2xf32>
    %18 = arith.mulf %16, %17 : vector<32x2xf32>
    %19 = arith.addf %13, %18 : vector<32x2xf32>
    %20 = vector.extract_strided_slice %1 {offsets = [0, 3], sizes = [32, 1], strides = [1, 1]} : vector<32x4xf32> to vector<32x1xf32>
    %21 = vector.extract_strided_slice %0 {offsets = [3, 0], sizes = [1, 2], strides = [1, 1]} : vector<4x2xf32> to vector<1x2xf32>
    %22 = vector.broadcast %20 : vector<32x1xf32> to vector<32x2xf32>
    %23 = vector.broadcast %21 : vector<1x2xf32> to vector<32x2xf32>
    %24 = arith.mulf %22, %23 : vector<32x2xf32>
    %25 = arith.addf %19, %24 : vector<32x2xf32>
    %c0_5 = arith.constant 0 : index
    %c0_6 = arith.constant 0 : index
    %26 = vector.load %arg2[%c0_5, %c0_6] : memref<32x1xf32, #tpu.memory_space<vmem>>, vector<32x1xf32>
    %27 = vector.broadcast %26 : vector<32x1xf32> to vector<32x2xf32>
    %28 = arith.addf %25, %27 : vector<32x2xf32>
    %cst = arith.constant 0.000000e+00 : f32
    %29 = vector.broadcast %cst : f32 to vector<32x2xf32>
    %30 = arith.maximumf %28, %29 : vector<32x2xf32>
    %31 = vector.extract_strided_slice %2 {offsets = [0, 0], sizes = [4, 1], strides = [1, 1]} : vector<4x32xf32> to vector<4x1xf32>
    %32 = vector.extract_strided_slice %30 {offsets = [0, 0], sizes = [1, 2], strides = [1, 1]} : vector<32x2xf32> to vector<1x2xf32>
    %33 = vector.broadcast %31 : vector<4x1xf32> to vector<4x2xf32>
    %34 = vector.broadcast %32 : vector<1x2xf32> to vector<4x2xf32>
    %35 = arith.mulf %33, %34 : vector<4x2xf32>
    %36 = vector.extract_strided_slice %2 {offsets = [0, 1], sizes = [4, 1], strides = [1, 1]} : vector<4x32xf32> to vector<4x1xf32>
    %37 = vector.extract_strided_slice %30 {offsets = [1, 0], sizes = [1, 2], strides = [1, 1]} : vector<32x2xf32> to vector<1x2xf32>
    %38 = vector.broadcast %36 : vector<4x1xf32> to vector<4x2xf32>
    %39 = vector.broadcast %37 : vector<1x2xf32> to vector<4x2xf32>
    %40 = arith.mulf %38, %39 : vector<4x2xf32>
    %41 = arith.addf %35, %40 : vector<4x2xf32>
    %42 = vector.extract_strided_slice %2 {offsets = [0, 2], sizes = [4, 1], strides = [1, 1]} : vector<4x32xf32> to vector<4x1xf32>
    %43 = vector.extract_strided_slice %30 {offsets = [2, 0], sizes = [1, 2], strides = [1, 1]} : vector<32x2xf32> to vector<1x2xf32>
    %44 = vector.broadcast %42 : vector<4x1xf32> to vector<4x2xf32>
    %45 = vector.broadcast %43 : vector<1x2xf32> to vector<4x2xf32>
    %46 = arith.mulf %44, %45 : vector<4x2xf32>
    %47 = arith.addf %41, %46 : vector<4x2xf32>
    %48 = vector.extract_strided_slice %2 {offsets = [0, 3], sizes = [4, 1], strides = [1, 1]} : vector<4x32xf32> to vector<4x1xf32>
    %49 = vector.extract_strided_slice %30 {offsets = [3, 0], sizes = [1, 2], strides = [1, 1]} : vector<32x2xf32> to vector<1x2xf32>
    %50 = vector.broadcast %48 : vector<4x1xf32> to vector<4x2xf32>
    %51 = vector.broadcast %49 : vector<1x2xf32> to vector<4x2xf32>
    %52 = arith.mulf %50, %51 : vector<4x2xf32>
    %53 = arith.addf %47, %52 : vector<4x2xf32>
    %54 = vector.extract_strided_slice %2 {offsets = [0, 4], sizes = [4, 1], strides = [1, 1]} : vector<4x32xf32> to vector<4x1xf32>
    %55 = vector.extract_strided_slice %30 {offsets = [4, 0], sizes = [1, 2], strides = [1, 1]} : vector<32x2xf32> to vector<1x2xf32>
    %56 = vector.broadcast %54 : vector<4x1xf32> to vector<4x2xf32>
    %57 = vector.broadcast %55 : vector<1x2xf32> to vector<4x2xf32>
    %58 = arith.mulf %56, %57 : vector<4x2xf32>
    %59 = arith.addf %53, %58 : vector<4x2xf32>
    %60 = vector.extract_strided_slice %2 {offsets = [0, 5], sizes = [4, 1], strides = [1, 1]} : vector<4x32xf32> to vector<4x1xf32>
    %61 = vector.extract_strided_slice %30 {offsets = [5, 0], sizes = [1, 2], strides = [1, 1]} : vector<32x2xf32> to vector<1x2xf32>
    %62 = vector.broadcast %60 : vector<4x1xf32> to vector<4x2xf32>
    %63 = vector.broadcast %61 : vector<1x2xf32> to vector<4x2xf32>
    %64 = arith.mulf %62, %63 : vector<4x2xf32>
    %65 = arith.addf %59, %64 : vector<4x2xf32>
    %66 = vector.extract_strided_slice %2 {offsets = [0, 6], sizes = [4, 1], strides = [1, 1]} : vector<4x32xf32> to vector<4x1xf32>
    %67 = vector.extract_strided_slice %30 {offsets = [6, 0], sizes = [1, 2], strides = [1, 1]} : vector<32x2xf32> to vector<1x2xf32>
    %68 = vector.broadcast %66 : vector<4x1xf32> to vector<4x2xf32>
    %69 = vector.broadcast %67 : vector<1x2xf32> to vector<4x2xf32>
    %70 = arith.mulf %68, %69 : vector<4x2xf32>
    %71 = arith.addf %65, %70 : vector<4x2xf32>
    %72 = vector.extract_strided_slice %2 {offsets = [0, 7], sizes = [4, 1], strides = [1, 1]} : vector<4x32xf32> to vector<4x1xf32>
    %73 = vector.extract_strided_slice %30 {offsets = [7, 0], sizes = [1, 2], strides = [1, 1]} : vector<32x2xf32> to vector<1x2xf32>
    %74 = vector.broadcast %72 : vector<4x1xf32> to vector<4x2xf32>
    %75 = vector.broadcast %73 : vector<1x2xf32> to vector<4x2xf32>
    %76 = arith.mulf %74, %75 : vector<4x2xf32>
    %77 = arith.addf %71, %76 : vector<4x2xf32>
    %78 = vector.extract_strided_slice %2 {offsets = [0, 8], sizes = [4, 1], strides = [1, 1]} : vector<4x32xf32> to vector<4x1xf32>
    %79 = vector.extract_strided_slice %30 {offsets = [8, 0], sizes = [1, 2], strides = [1, 1]} : vector<32x2xf32> to vector<1x2xf32>
    %80 = vector.broadcast %78 : vector<4x1xf32> to vector<4x2xf32>
    %81 = vector.broadcast %79 : vector<1x2xf32> to vector<4x2xf32>
    %82 = arith.mulf %80, %81 : vector<4x2xf32>
    %83 = arith.addf %77, %82 : vector<4x2xf32>
    %84 = vector.extract_strided_slice %2 {offsets = [0, 9], sizes = [4, 1], strides = [1, 1]} : vector<4x32xf32> to vector<4x1xf32>
    %85 = vector.extract_strided_slice %30 {offsets = [9, 0], sizes = [1, 2], strides = [1, 1]} : vector<32x2xf32> to vector<1x2xf32>
    %86 = vector.broadcast %84 : vector<4x1xf32> to vector<4x2xf32>
    %87 = vector.broadcast %85 : vector<1x2xf32> to vector<4x2xf32>
    %88 = arith.mulf %86, %87 : vector<4x2xf32>
    %89 = arith.addf %83, %88 : vector<4x2xf32>
    %90 = vector.extract_strided_slice %2 {offsets = [0, 10], sizes = [4, 1], strides = [1, 1]} : vector<4x32xf32> to vector<4x1xf32>
    %91 = vector.extract_strided_slice %30 {offsets = [10, 0], sizes = [1, 2], strides = [1, 1]} : vector<32x2xf32> to vector<1x2xf32>
    %92 = vector.broadcast %90 : vector<4x1xf32> to vector<4x2xf32>
    %93 = vector.broadcast %91 : vector<1x2xf32> to vector<4x2xf32>
    %94 = arith.mulf %92, %93 : vector<4x2xf32>
    %95 = arith.addf %89, %94 : vector<4x2xf32>
    %96 = vector.extract_strided_slice %2 {offsets = [0, 11], sizes = [4, 1], strides = [1, 1]} : vector<4x32xf32> to vector<4x1xf32>
    %97 = vector.extract_strided_slice %30 {offsets = [11, 0], sizes = [1, 2], strides = [1, 1]} : vector<32x2xf32> to vector<1x2xf32>
    %98 = vector.broadcast %96 : vector<4x1xf32> to vector<4x2xf32>
    %99 = vector.broadcast %97 : vector<1x2xf32> to vector<4x2xf32>
    %100 = arith.mulf %98, %99 : vector<4x2xf32>
    %101 = arith.addf %95, %100 : vector<4x2xf32>
    %102 = vector.extract_strided_slice %2 {offsets = [0, 12], sizes = [4, 1], strides = [1, 1]} : vector<4x32xf32> to vector<4x1xf32>
    %103 = vector.extract_strided_slice %30 {offsets = [12, 0], sizes = [1, 2], strides = [1, 1]} : vector<32x2xf32> to vector<1x2xf32>
    %104 = vector.broadcast %102 : vector<4x1xf32> to vector<4x2xf32>
    %105 = vector.broadcast %103 : vector<1x2xf32> to vector<4x2xf32>
    %106 = arith.mulf %104, %105 : vector<4x2xf32>
    %107 = arith.addf %101, %106 : vector<4x2xf32>
    %108 = vector.extract_strided_slice %2 {offsets = [0, 13], sizes = [4, 1], strides = [1, 1]} : vector<4x32xf32> to vector<4x1xf32>
    %109 = vector.extract_strided_slice %30 {offsets = [13, 0], sizes = [1, 2], strides = [1, 1]} : vector<32x2xf32> to vector<1x2xf32>
    %110 = vector.broadcast %108 : vector<4x1xf32> to vector<4x2xf32>
    %111 = vector.broadcast %109 : vector<1x2xf32> to vector<4x2xf32>
    %112 = arith.mulf %110, %111 : vector<4x2xf32>
    %113 = arith.addf %107, %112 : vector<4x2xf32>
    %114 = vector.extract_strided_slice %2 {offsets = [0, 14], sizes = [4, 1], strides = [1, 1]} : vector<4x32xf32> to vector<4x1xf32>
    %115 = vector.extract_strided_slice %30 {offsets = [14, 0], sizes = [1, 2], strides = [1, 1]} : vector<32x2xf32> to vector<1x2xf32>
    %116 = vector.broadcast %114 : vector<4x1xf32> to vector<4x2xf32>
    %117 = vector.broadcast %115 : vector<1x2xf32> to vector<4x2xf32>
    %118 = arith.mulf %116, %117 : vector<4x2xf32>
    %119 = arith.addf %113, %118 : vector<4x2xf32>
    %120 = vector.extract_strided_slice %2 {offsets = [0, 15], sizes = [4, 1], strides = [1, 1]} : vector<4x32xf32> to vector<4x1xf32>
    %121 = vector.extract_strided_slice %30 {offsets = [15, 0], sizes = [1, 2], strides = [1, 1]} : vector<32x2xf32> to vector<1x2xf32>
    %122 = vector.broadcast %120 : vector<4x1xf32> to vector<4x2xf32>
    %123 = vector.broadcast %121 : vector<1x2xf32> to vector<4x2xf32>
    %124 = arith.mulf %122, %123 : vector<4x2xf32>
    %125 = arith.addf %119, %124 : vector<4x2xf32>
    %126 = vector.extract_strided_slice %2 {offsets = [0, 16], sizes = [4, 1], strides = [1, 1]} : vector<4x32xf32> to vector<4x1xf32>
    %127 = vector.extract_strided_slice %30 {offsets = [16, 0], sizes = [1, 2], strides = [1, 1]} : vector<32x2xf32> to vector<1x2xf32>
    %128 = vector.broadcast %126 : vector<4x1xf32> to vector<4x2xf32>
    %129 = vector.broadcast %127 : vector<1x2xf32> to vector<4x2xf32>
    %130 = arith.mulf %128, %129 : vector<4x2xf32>
    %131 = arith.addf %125, %130 : vector<4x2xf32>
    %132 = vector.extract_strided_slice %2 {offsets = [0, 17], sizes = [4, 1], strides = [1, 1]} : vector<4x32xf32> to vector<4x1xf32>
    %133 = vector.extract_strided_slice %30 {offsets = [17, 0], sizes = [1, 2], strides = [1, 1]} : vector<32x2xf32> to vector<1x2xf32>
    %134 = vector.broadcast %132 : vector<4x1xf32> to vector<4x2xf32>
    %135 = vector.broadcast %133 : vector<1x2xf32> to vector<4x2xf32>
    %136 = arith.mulf %134, %135 : vector<4x2xf32>
    %137 = arith.addf %131, %136 : vector<4x2xf32>
    %138 = vector.extract_strided_slice %2 {offsets = [0, 18], sizes = [4, 1], strides = [1, 1]} : vector<4x32xf32> to vector<4x1xf32>
    %139 = vector.extract_strided_slice %30 {offsets = [18, 0], sizes = [1, 2], strides = [1, 1]} : vector<32x2xf32> to vector<1x2xf32>
    %140 = vector.broadcast %138 : vector<4x1xf32> to vector<4x2xf32>
    %141 = vector.broadcast %139 : vector<1x2xf32> to vector<4x2xf32>
    %142 = arith.mulf %140, %141 : vector<4x2xf32>
    %143 = arith.addf %137, %142 : vector<4x2xf32>
    %144 = vector.extract_strided_slice %2 {offsets = [0, 19], sizes = [4, 1], strides = [1, 1]} : vector<4x32xf32> to vector<4x1xf32>
    %145 = vector.extract_strided_slice %30 {offsets = [19, 0], sizes = [1, 2], strides = [1, 1]} : vector<32x2xf32> to vector<1x2xf32>
    %146 = vector.broadcast %144 : vector<4x1xf32> to vector<4x2xf32>
    %147 = vector.broadcast %145 : vector<1x2xf32> to vector<4x2xf32>
    %148 = arith.mulf %146, %147 : vector<4x2xf32>
    %149 = arith.addf %143, %148 : vector<4x2xf32>
    %150 = vector.extract_strided_slice %2 {offsets = [0, 20], sizes = [4, 1], strides = [1, 1]} : vector<4x32xf32> to vector<4x1xf32>
    %151 = vector.extract_strided_slice %30 {offsets = [20, 0], sizes = [1, 2], strides = [1, 1]} : vector<32x2xf32> to vector<1x2xf32>
    %152 = vector.broadcast %150 : vector<4x1xf32> to vector<4x2xf32>
    %153 = vector.broadcast %151 : vector<1x2xf32> to vector<4x2xf32>
    %154 = arith.mulf %152, %153 : vector<4x2xf32>
    %155 = arith.addf %149, %154 : vector<4x2xf32>
    %156 = vector.extract_strided_slice %2 {offsets = [0, 21], sizes = [4, 1], strides = [1, 1]} : vector<4x32xf32> to vector<4x1xf32>
    %157 = vector.extract_strided_slice %30 {offsets = [21, 0], sizes = [1, 2], strides = [1, 1]} : vector<32x2xf32> to vector<1x2xf32>
    %158 = vector.broadcast %156 : vector<4x1xf32> to vector<4x2xf32>
    %159 = vector.broadcast %157 : vector<1x2xf32> to vector<4x2xf32>
    %160 = arith.mulf %158, %159 : vector<4x2xf32>
    %161 = arith.addf %155, %160 : vector<4x2xf32>
    %162 = vector.extract_strided_slice %2 {offsets = [0, 22], sizes = [4, 1], strides = [1, 1]} : vector<4x32xf32> to vector<4x1xf32>
    %163 = vector.extract_strided_slice %30 {offsets = [22, 0], sizes = [1, 2], strides = [1, 1]} : vector<32x2xf32> to vector<1x2xf32>
    %164 = vector.broadcast %162 : vector<4x1xf32> to vector<4x2xf32>
    %165 = vector.broadcast %163 : vector<1x2xf32> to vector<4x2xf32>
    %166 = arith.mulf %164, %165 : vector<4x2xf32>
    %167 = arith.addf %161, %166 : vector<4x2xf32>
    %168 = vector.extract_strided_slice %2 {offsets = [0, 23], sizes = [4, 1], strides = [1, 1]} : vector<4x32xf32> to vector<4x1xf32>
    %169 = vector.extract_strided_slice %30 {offsets = [23, 0], sizes = [1, 2], strides = [1, 1]} : vector<32x2xf32> to vector<1x2xf32>
    %170 = vector.broadcast %168 : vector<4x1xf32> to vector<4x2xf32>
    %171 = vector.broadcast %169 : vector<1x2xf32> to vector<4x2xf32>
    %172 = arith.mulf %170, %171 : vector<4x2xf32>
    %173 = arith.addf %167, %172 : vector<4x2xf32>
    %174 = vector.extract_strided_slice %2 {offsets = [0, 24], sizes = [4, 1], strides = [1, 1]} : vector<4x32xf32> to vector<4x1xf32>
    %175 = vector.extract_strided_slice %30 {offsets = [24, 0], sizes = [1, 2], strides = [1, 1]} : vector<32x2xf32> to vector<1x2xf32>
    %176 = vector.broadcast %174 : vector<4x1xf32> to vector<4x2xf32>
    %177 = vector.broadcast %175 : vector<1x2xf32> to vector<4x2xf32>
    %178 = arith.mulf %176, %177 : vector<4x2xf32>
    %179 = arith.addf %173, %178 : vector<4x2xf32>
    %180 = vector.extract_strided_slice %2 {offsets = [0, 25], sizes = [4, 1], strides = [1, 1]} : vector<4x32xf32> to vector<4x1xf32>
    %181 = vector.extract_strided_slice %30 {offsets = [25, 0], sizes = [1, 2], strides = [1, 1]} : vector<32x2xf32> to vector<1x2xf32>
    %182 = vector.broadcast %180 : vector<4x1xf32> to vector<4x2xf32>
    %183 = vector.broadcast %181 : vector<1x2xf32> to vector<4x2xf32>
    %184 = arith.mulf %182, %183 : vector<4x2xf32>
    %185 = arith.addf %179, %184 : vector<4x2xf32>
    %186 = vector.extract_strided_slice %2 {offsets = [0, 26], sizes = [4, 1], strides = [1, 1]} : vector<4x32xf32> to vector<4x1xf32>
    %187 = vector.extract_strided_slice %30 {offsets = [26, 0], sizes = [1, 2], strides = [1, 1]} : vector<32x2xf32> to vector<1x2xf32>
    %188 = vector.broadcast %186 : vector<4x1xf32> to vector<4x2xf32>
    %189 = vector.broadcast %187 : vector<1x2xf32> to vector<4x2xf32>
    %190 = arith.mulf %188, %189 : vector<4x2xf32>
    %191 = arith.addf %185, %190 : vector<4x2xf32>
    %192 = vector.extract_strided_slice %2 {offsets = [0, 27], sizes = [4, 1], strides = [1, 1]} : vector<4x32xf32> to vector<4x1xf32>
    %193 = vector.extract_strided_slice %30 {offsets = [27, 0], sizes = [1, 2], strides = [1, 1]} : vector<32x2xf32> to vector<1x2xf32>
    %194 = vector.broadcast %192 : vector<4x1xf32> to vector<4x2xf32>
    %195 = vector.broadcast %193 : vector<1x2xf32> to vector<4x2xf32>
    %196 = arith.mulf %194, %195 : vector<4x2xf32>
    %197 = arith.addf %191, %196 : vector<4x2xf32>
    %198 = vector.extract_strided_slice %2 {offsets = [0, 28], sizes = [4, 1], strides = [1, 1]} : vector<4x32xf32> to vector<4x1xf32>
    %199 = vector.extract_strided_slice %30 {offsets = [28, 0], sizes = [1, 2], strides = [1, 1]} : vector<32x2xf32> to vector<1x2xf32>
    %200 = vector.broadcast %198 : vector<4x1xf32> to vector<4x2xf32>
    %201 = vector.broadcast %199 : vector<1x2xf32> to vector<4x2xf32>
    %202 = arith.mulf %200, %201 : vector<4x2xf32>
    %203 = arith.addf %197, %202 : vector<4x2xf32>
    %204 = vector.extract_strided_slice %2 {offsets = [0, 29], sizes = [4, 1], strides = [1, 1]} : vector<4x32xf32> to vector<4x1xf32>
    %205 = vector.extract_strided_slice %30 {offsets = [29, 0], sizes = [1, 2], strides = [1, 1]} : vector<32x2xf32> to vector<1x2xf32>
    %206 = vector.broadcast %204 : vector<4x1xf32> to vector<4x2xf32>
    %207 = vector.broadcast %205 : vector<1x2xf32> to vector<4x2xf32>
    %208 = arith.mulf %206, %207 : vector<4x2xf32>
    %209 = arith.addf %203, %208 : vector<4x2xf32>
    %210 = vector.extract_strided_slice %2 {offsets = [0, 30], sizes = [4, 1], strides = [1, 1]} : vector<4x32xf32> to vector<4x1xf32>
    %211 = vector.extract_strided_slice %30 {offsets = [30, 0], sizes = [1, 2], strides = [1, 1]} : vector<32x2xf32> to vector<1x2xf32>
    %212 = vector.broadcast %210 : vector<4x1xf32> to vector<4x2xf32>
    %213 = vector.broadcast %211 : vector<1x2xf32> to vector<4x2xf32>
    %214 = arith.mulf %212, %213 : vector<4x2xf32>
    %215 = arith.addf %209, %214 : vector<4x2xf32>
    %216 = vector.extract_strided_slice %2 {offsets = [0, 31], sizes = [4, 1], strides = [1, 1]} : vector<4x32xf32> to vector<4x1xf32>
    %217 = vector.extract_strided_slice %30 {offsets = [31, 0], sizes = [1, 2], strides = [1, 1]} : vector<32x2xf32> to vector<1x2xf32>
    %218 = vector.broadcast %216 : vector<4x1xf32> to vector<4x2xf32>
    %219 = vector.broadcast %217 : vector<1x2xf32> to vector<4x2xf32>
    %220 = arith.mulf %218, %219 : vector<4x2xf32>
    %221 = arith.addf %215, %220 : vector<4x2xf32>
    %c0_7 = arith.constant 0 : index
    %c0_8 = arith.constant 0 : index
    %222 = vector.load %arg4[%c0_7, %c0_8] : memref<4x1xf32, #tpu.memory_space<vmem>>, vector<4x1xf32>
    %223 = vector.broadcast %222 : vector<4x1xf32> to vector<4x2xf32>
    %224 = arith.addf %221, %223 : vector<4x2xf32>
    %cst_9 = arith.constant dense<0xFF800000> : vector<2xf32>
    %225 = vector.multi_reduction <maximumf>, %224, %cst_9 [0] : vector<4x2xf32> to vector<2xf32>
    %226 = vector.shape_cast %225 : vector<2xf32> to vector<1x2xf32>
    %227 = vector.broadcast %226 : vector<1x2xf32> to vector<4x2xf32>
    %228 = arith.subf %224, %227 : vector<4x2xf32>
    %229 = math.exp %228 : vector<4x2xf32>
    %cst_10 = arith.constant dense<0.000000e+00> : vector<2xf32>
    %230 = vector.multi_reduction <add>, %229, %cst_10 [0] : vector<4x2xf32> to vector<2xf32>
    %231 = vector.shape_cast %230 : vector<2xf32> to vector<1x2xf32>
    %232 = vector.broadcast %231 : vector<1x2xf32> to vector<4x2xf32>
    %233 = arith.divf %229, %232 : vector<4x2xf32>
    %c0_11 = arith.constant 0 : index
    %c0_12 = arith.constant 0 : index
    %234 = vector.load %arg5[%c0_11, %c0_12] : memref<4x2xf32, #tpu.memory_space<vmem>>, vector<4x2xf32>
    tpu.vector_store %arg5[%c0_11, %c0_12], %233 {strides = array<i32>} : memref<4x2xf32, #tpu.memory_space<vmem>>, vector<4x2xf32>,
    return
  }
}

</mosaic_0001>

<llo_original>
// kernel: tpu_custom_call.1
$region0: #{tpu_custom_call.1}
  #allocation0 [shape = 'u32[]', space=smem, size = 0x4, offset = 0x4, fixed_abs, tag = 'smem constant byte address 0x4 - core index']
  #allocation1 [shape = 'u32[144,128]{1,0:T(1,128)}', space=vmem, size = 0x12000, scoped, tag = 'internal scratch']
  %s0 = inlined_call_operand.vmem [shape: f32[4,2], index: 0, kind: input, shape index: {}]
  %s1 = inlined_call_operand.vmem [shape: f32[32,4], index: 1, kind: input, shape index: {}]
  %s2 = inlined_call_operand.vmem [shape: f32[32,1], index: 2, kind: input, shape index: {}]
  %s3 = inlined_call_operand.vmem [shape: f32[4,32], index: 3, kind: input, shape index: {}]
  %s4 = inlined_call_operand.vmem [shape: f32[4,1], index: 4, kind: input, shape index: {}]
  %s5 = inlined_call_operand.vmem [shape: f32[4,2], index: 5, kind: output, shape index: {}]
  %s6 = sld [smem:[#allocation0]]
  $region30: #{tpu_custom_call.1} parent=0
    _
  %s8 = ssub.s32 1, %s6
  %s9 = scalar_select 0, %s8, %s6
  // Predicated region
  $region2: #{tpu_custom_call.1} parent=0 // pred_check
    _
  $region3: #{tpu_custom_call.1} parent=0 // pred_check_branch
    %11 = sbr.rel (0) target = $region5
  $region4: #{tpu_custom_call.1} parent=0 // pred_region
    _
  $region5: #{tpu_custom_call.1} parent=0 // pred_fallthru
    _
  // Predicated region
  $region6: #{tpu_custom_call.1} parent=0 // pred_check
    _
  $region7: #{tpu_custom_call.1} parent=0 // pred_check_branch
    %13 = sbr.rel (0) target = $region9
  $region8: #{tpu_custom_call.1} parent=0 // pred_region
    _
  $region9: #{tpu_custom_call.1} parent=0 // pred_fallthru
    _
  // Predicated region
  $region10: #{tpu_custom_call.1} parent=0 // pred_check
    _
  $region11: #{tpu_custom_call.1} parent=0 // pred_check_branch
    %15 = sbr.rel (0) target = $region13
  $region12: #{tpu_custom_call.1} parent=0 // pred_region
    _
  $region13: #{tpu_custom_call.1} parent=0 // pred_fallthru
    _
  // Predicated region
  $region14: #{tpu_custom_call.1} parent=0 // pred_check
    _
  $region15: #{tpu_custom_call.1} parent=0 // pred_check_branch
    %17 = sbr.rel (0) target = $region17
  $region16: #{tpu_custom_call.1} parent=0 // pred_region
    _
  $region17: #{tpu_custom_call.1} parent=0 // pred_fallthru
    _
  // Predicated region
  $region18: #{tpu_custom_call.1} parent=0 // pred_check
    _
  $region19: #{tpu_custom_call.1} parent=0 // pred_check_branch
    %19 = sbr.rel (0) target = $region21
  $region20: #{tpu_custom_call.1} parent=0 // pred_region
    _
  $region21: #{tpu_custom_call.1} parent=0 // pred_fallthru
    _
  %v20 = vld [vmem:[%s0] sm:$0xf]
  %v21 = vld [vmem:[%s1] sm:$0xff]
  %v22 = vld [vmem:[%s1 + $0x8] sm:$0xff]
  %v23 = vld [vmem:[%s1 + $0x10] sm:$0xff]
  %v24 = vld [vmem:[%s1 + $0x18] sm:$0xff]
  %v25 = vld [vmem:[%s3] sm:$0xf]
  %27 = vset.pattern.permute.xlu0 0
  %28 = vperm.xlu0 %27, %v21
  %v29 = vpop.permute.xlu0 %28
  %32 = vset.pattern.permute.xlu0 0
  %33 = vperm.xlu0 %32, %v22
  %v34 = vpop.permute.xlu0 %33
  %37 = vset.pattern.permute.xlu0 0
  %38 = vperm.xlu0 %37, %v23
  %v39 = vpop.permute.xlu0 %38
  %42 = vset.pattern.permute.xlu0 0
  %43 = vperm.xlu0 %42, %v24
  %v44 = vpop.permute.xlu0 %43
  %v46 = vlaneseq
  %v47 = vshrl.u32 %v46, 7
  %v48 = vsub.s32 0, %v47
  %v49 = vrot.slane %v20, %v48
  %v50 = vmul.f32 %v29, %v49
  %v51 = vmul.f32 %v34, %v49
  %v52 = vmul.f32 %v39, %v49
  %v53 = vmul.f32 %v44, %v49
  %54 = vset.pattern.permute.xlu0 1
  %55 = vperm.xlu0 %54, %v21
  %v56 = vpop.permute.xlu0 %55
  %58 = vset.pattern.permute.xlu0 1
  %59 = vperm.xlu0 %58, %v22
  %v60 = vpop.permute.xlu0 %59
  %62 = vset.pattern.permute.xlu0 1
  %63 = vperm.xlu0 %62, %v23
  %v64 = vpop.permute.xlu0 %63
  %66 = vset.pattern.permute.xlu0 1
  %67 = vperm.xlu0 %66, %v24
  %v68 = vpop.permute.xlu0 %67
  %v70 = vlaneseq
  %v71 = vshrl.u32 %v70, 7
  %v72 = vsub.s32 1, %v71
  %v73 = vrot.slane %v20, %v72
  %v74 = vmul.f32 %v56, %v73
  %v75 = vmul.f32 %v60, %v73
  %v76 = vmul.f32 %v64, %v73
  %v77 = vmul.f32 %v68, %v73
  %v78 = vadd.f32 %v50, %v74
  %v79 = vadd.f32 %v51, %v75
  %v80 = vadd.f32 %v52, %v76
  %v81 = vadd.f32 %v53, %v77
  %82 = vset.pattern.permute.xlu0 2
  %83 = vperm.xlu0 %82, %v21
  %v84 = vpop.permute.xlu0 %83
  %86 = vset.pattern.permute.xlu0 2
  %87 = vperm.xlu0 %86, %v22
  %v88 = vpop.permute.xlu0 %87
  %90 = vset.pattern.permute.xlu0 2
  %91 = vperm.xlu0 %90, %v23
  %v92 = vpop.permute.xlu0 %91
  %94 = vset.pattern.permute.xlu0 2
  %95 = vperm.xlu0 %94, %v24
  %v96 = vpop.permute.xlu0 %95
  %v98 = vlaneseq
  %v99 = vshrl.u32 %v98, 7
  %v100 = vsub.s32 2, %v99
  %v101 = vrot.slane %v20, %v100
  %v102 = vmul.f32 %v84, %v101
  %v103 = vmul.f32 %v88, %v101
  %v104 = vmul.f32 %v92, %v101
  %v105 = vmul.f32 %v96, %v101
  %v106 = vadd.f32 %v78, %v102
  %v107 = vadd.f32 %v79, %v103
  %v108 = vadd.f32 %v80, %v104
  %v109 = vadd.f32 %v81, %v105
  %110 = vset.pattern.permute.xlu0 3
  %111 = vperm.xlu0 %110, %v21
  %v112 = vpop.permute.xlu0 %111
  %114 = vset.pattern.permute.xlu0 3
  %115 = vperm.xlu0 %114, %v22
  %v116 = vpop.permute.xlu0 %115
  %118 = vset.pattern.permute.xlu0 3
  %119 = vperm.xlu0 %118, %v23
  %v120 = vpop.permute.xlu0 %119
  %122 = vset.pattern.permute.xlu0 3
  %123 = vperm.xlu0 %122, %v24
  %v124 = vpop.permute.xlu0 %123
  %v126 = vlaneseq
  %v127 = vshrl.u32 %v126, 7
  %v128 = vsub.s32 3, %v127
  %v129 = vrot.slane %v20, %v128
  %v130 = vmul.f32 %v112, %v129
  %v131 = vmul.f32 %v116, %v129
  %v132 = vmul.f32 %v120, %v129
  %v133 = vmul.f32 %v124, %v129
  %v134 = vadd.f32 %v106, %v130
  %v135 = vadd.f32 %v107, %v131
  %v136 = vadd.f32 %v108, %v132
  %v137 = vadd.f32 %v109, %v133
  %v138 = vld [vmem:[%s2] sm:$0xff]
  %v139 = vld [vmem:[%s2 + $0x8] sm:$0xff]
  %v140 = vld [vmem:[%s2 + $0x10] sm:$0xff]
  %v141 = vld [vmem:[%s2 + $0x18] sm:$0xff]
  %143 = vset.pattern.permute.xlu0 0
  %144 = vperm.xlu0 %143, %v138
  %v145 = vpop.permute.xlu0 %144
  %148 = vset.pattern.permute.xlu0 0
  %149 = vperm.xlu0 %148, %v139
  %v150 = vpop.permute.xlu0 %149
  %153 = vset.pattern.permute.xlu0 0
  %154 = vperm.xlu0 %153, %v140
  %v155 = vpop.permute.xlu0 %154
  %158 = vset.pattern.permute.xlu0 0
  %159 = vperm.xlu0 %158, %v141
  %v160 = vpop.permute.xlu0 %159
  %v162 = vadd.f32 %v134, %v145
  %v163 = vadd.f32 %v135, %v150
  %v164 = vadd.f32 %v136, %v155
  %v165 = vadd.f32 %v137, %v160
  %v166 = vmax.f32 %v162, 0.0
  %v167 = vmax.f32 %v163, 0.0
  %v168 = vmax.f32 %v164, 0.0
  %v169 = vmax.f32 %v165, 0.0
  %171 = vset.pattern.permute.xlu0 0
  %172 = vperm.xlu0 %171, %v25
  %v173 = vpop.permute.xlu0 %172
  %v175 = vlaneseq
  %v176 = vshrl.u32 %v175, 7
  %v177 = vsub.s32 0, %v176
  %v178 = vrot.slane %v166, %v177
  %v179 = vmul.f32 %v173, %v178
  %180 = vset.pattern.permute.xlu0 1
  %181 = vperm.xlu0 %180, %v25
  %v182 = vpop.permute.xlu0 %181
  %v184 = vlaneseq
  %v185 = vshrl.u32 %v184, 7
  %v186 = vsub.s32 1, %v185
  %v187 = vrot.slane %v166, %v186
  %v188 = vmul.f32 %v182, %v187
  %v189 = vadd.f32 %v179, %v188
  %190 = vset.pattern.permute.xlu0 2
  %191 = vperm.xlu0 %190, %v25
  %v192 = vpop.permute.xlu0 %191
  %v194 = vlaneseq
  %v195 = vshrl.u32 %v194, 7
  %v196 = vsub.s32 2, %v195
  %v197 = vrot.slane %v166, %v196
  %v198 = vmul.f32 %v192, %v197
  %v199 = vadd.f32 %v189, %v198
  %200 = vset.pattern.permute.xlu0 3
  %201 = vperm.xlu0 %200, %v25
  %v202 = vpop.permute.xlu0 %201
  %v204 = vlaneseq
  %v205 = vshrl.u32 %v204, 7
  %v206 = vsub.s32 3, %v205
  %v207 = vrot.slane %v166, %v206
  %v208 = vmul.f32 %v202, %v207
  %v209 = vadd.f32 %v199, %v208
  %210 = vset.pattern.permute.xlu0 4
  %211 = vperm.xlu0 %210, %v25
  %v212 = vpop.permute.xlu0 %211
  %v214 = vlaneseq
  %v215 = vshrl.u32 %v214, 7
  %v216 = vsub.s32 4, %v215
  %v217 = vrot.slane %v166, %v216
  %v218 = vmul.f32 %v212, %v217
  %v219 = vadd.f32 %v209, %v218
  %220 = vset.pattern.permute.xlu0 5
  %221 = vperm.xlu0 %220, %v25
  %v222 = vpop.permute.xlu0 %221
  %v224 = vlaneseq
  %v225 = vshrl.u32 %v224, 7
  %v226 = vsub.s32 5, %v225
  %v227 = vrot.slane %v166, %v226
  %v228 = vmul.f32 %v222, %v227
  %v229 = vadd.f32 %v219, %v228
  %230 = vset.pattern.permute.xlu0 6
  %231 = vperm.xlu0 %230, %v25
  %v232 = vpop.permute.xlu0 %231
  %v234 = vlaneseq
  %v235 = vshrl.u32 %v234, 7
  %v236 = vsub.s32 6, %v235
  %v237 = vrot.slane %v166, %v236
  %v238 = vmul.f32 %v232, %v237
  %v239 = vadd.f32 %v229, %v238
  %240 = vset.pattern.permute.xlu0 7
  %241 = vperm.xlu0 %240, %v25
  %v242 = vpop.permute.xlu0 %241
  %v244 = vlaneseq
  %v245 = vshrl.u32 %v244, 7
  %v246 = vsub.s32 7, %v245
  %v247 = vrot.slane %v166, %v246
  %v248 = vmul.f32 %v242, %v247
  %v249 = vadd.f32 %v239, %v248
  %250 = vset.pattern.permute.xlu0 8
  %251 = vperm.xlu0 %250, %v25
  %v252 = vpop.permute.xlu0 %251
  %v254 = vlaneseq
  %v255 = vshrl.u32 %v254, 7
  %v256 = vsub.s32 0, %v255
  %v257 = vrot.slane %v167, %v256
  %v258 = vmul.f32 %v252, %v257
  %v259 = vadd.f32 %v249, %v258
  %260 = vset.pattern.permute.xlu0 9
  %261 = vperm.xlu0 %260, %v25
  %v262 = vpop.permute.xlu0 %261
  %v264 = vlaneseq
  %v265 = vshrl.u32 %v264, 7
  %v266 = vsub.s32 1, %v265
  %v267 = vrot.slane %v167, %v266
  %v268 = vmul.f32 %v262, %v267
  %v269 = vadd.f32 %v259, %v268
  %270 = vset.pattern.permute.xlu0 10
  %271 = vperm.xlu0 %270, %v25
  %v272 = vpop.permute.xlu0 %271
  %v274 = vlaneseq
  %v275 = vshrl.u32 %v274, 7
  %v276 = vsub.s32 2, %v275
  %v277 = vrot.slane %v167, %v276
  %v278 = vmul.f32 %v272, %v277
  %v279 = vadd.f32 %v269, %v278
  %280 = vset.pattern.permute.xlu0 11
  %281 = vperm.xlu0 %280, %v25
  %v282 = vpop.permute.xlu0 %281
  %v284 = vlaneseq
  %v285 = vshrl.u32 %v284, 7
  %v286 = vsub.s32 3, %v285
  %v287 = vrot.slane %v167, %v286
  %v288 = vmul.f32 %v282, %v287
  %v289 = vadd.f32 %v279, %v288
  %290 = vset.pattern.permute.xlu0 12
  %291 = vperm.xlu0 %290, %v25
  %v292 = vpop.permute.xlu0 %291
  %v294 = vlaneseq
  %v295 = vshrl.u32 %v294, 7
  %v296 = vsub.s32 4, %v295
  %v297 = vrot.slane %v167, %v296
  %v298 = vmul.f32 %v292, %v297
  %v299 = vadd.f32 %v289, %v298
  %300 = vset.pattern.permute.xlu0 13
  %301 = vperm.xlu0 %300, %v25
  %v302 = vpop.permute.xlu0 %301
  %v304 = vlaneseq
  %v305 = vshrl.u32 %v304, 7
  %v306 = vsub.s32 5, %v305
  %v307 = vrot.slane %v167, %v306
  %v308 = vmul.f32 %v302, %v307
  %v309 = vadd.f32 %v299, %v308
  %310 = vset.pattern.permute.xlu0 14
  %311 = vperm.xlu0 %310, %v25
  %v312 = vpop.permute.xlu0 %311
  %v314 = vlaneseq
  %v315 = vshrl.u32 %v314, 7
  %v316 = vsub.s32 6, %v315
  %v317 = vrot.slane %v167, %v316
  %v318 = vmul.f32 %v312, %v317
  %v319 = vadd.f32 %v309, %v318
  %320 = vset.pattern.permute.xlu0 15
  %321 = vperm.xlu0 %320, %v25
  %v322 = vpop.permute.xlu0 %321
  %v324 = vlaneseq
  %v325 = vshrl.u32 %v324, 7
  %v326 = vsub.s32 7, %v325
  %v327 = vrot.slane %v167, %v326
  %v328 = vmul.f32 %v322, %v327
  %v329 = vadd.f32 %v319, %v328
  %330 = vset.pattern.permute.xlu0 16
  %331 = vperm.xlu0 %330, %v25
  %v332 = vpop.permute.xlu0 %331
  %v334 = vlaneseq
  %v335 = vshrl.u32 %v334, 7
  %v336 = vsub.s32 0, %v335
  %v337 = vrot.slane %v168, %v336
  %v338 = vmul.f32 %v332, %v337
  %v339 = vadd.f32 %v329, %v338
  %340 = vset.pattern.permute.xlu0 17
  %341 = vperm.xlu0 %340, %v25
  %v342 = vpop.permute.xlu0 %341
  %v344 = vlaneseq
  %v345 = vshrl.u32 %v344, 7
  %v346 = vsub.s32 1, %v345
  %v347 = vrot.slane %v168, %v346
  %v348 = vmul.f32 %v342, %v347
  %v349 = vadd.f32 %v339, %v348
  %350 = vset.pattern.permute.xlu0 18
  %351 = vperm.xlu0 %350, %v25
  %v352 = vpop.permute.xlu0 %351
  %v354 = vlaneseq
  %v355 = vshrl.u32 %v354, 7
  %v356 = vsub.s32 2, %v355
  %v357 = vrot.slane %v168, %v356
  %v358 = vmul.f32 %v352, %v357
  %v359 = vadd.f32 %v349, %v358
  %360 = vset.pattern.permute.xlu0 19
  %361 = vperm.xlu0 %360, %v25
  %v362 = vpop.permute.xlu0 %361
  %v364 = vlaneseq
  %v365 = vshrl.u32 %v364, 7
  %v366 = vsub.s32 3, %v365
  %v367 = vrot.slane %v168, %v366
  %v368 = vmul.f32 %v362, %v367
  %v369 = vadd.f32 %v359, %v368
  %370 = vset.pattern.permute.xlu0 20
  %371 = vperm.xlu0 %370, %v25
  %v372 = vpop.permute.xlu0 %371
  %v374 = vlaneseq
  %v375 = vshrl.u32 %v374, 7
  %v376 = vsub.s32 4, %v375
  %v377 = vrot.slane %v168, %v376
  %v378 = vmul.f32 %v372, %v377
  %v379 = vadd.f32 %v369, %v378
  %380 = vset.pattern.permute.xlu0 21
  %381 = vperm.xlu0 %380, %v25
  %v382 = vpop.permute.xlu0 %381
  %v384 = vlaneseq
  %v385 = vshrl.u32 %v384, 7
  %v386 = vsub.s32 5, %v385
  %v387 = vrot.slane %v168, %v386
  %v388 = vmul.f32 %v382, %v387
  %v389 = vadd.f32 %v379, %v388
  %390 = vset.pattern.permute.xlu0 22
  %391 = vperm.xlu0 %390, %v25
  %v392 = vpop.permute.xlu0 %391
  %v394 = vlaneseq
  %v395 = vshrl.u32 %v394, 7
  %v396 = vsub.s32 6, %v395
  %v397 = vrot.slane %v168, %v396
  %v398 = vmul.f32 %v392, %v397
  %v399 = vadd.f32 %v389, %v398
  %400 = vset.pattern.permute.xlu0 23
  %401 = vperm.xlu0 %400, %v25
  %v402 = vpop.permute.xlu0 %401
  %v404 = vlaneseq
  %v405 = vshrl.u32 %v404, 7
  %v406 = vsub.s32 7, %v405
  %v407 = vrot.slane %v168, %v406
  %v408 = vmul.f32 %v402, %v407
  %v409 = vadd.f32 %v399, %v408
  %410 = vset.pattern.permute.xlu0 24
  %411 = vperm.xlu0 %410, %v25
  %v412 = vpop.permute.xlu0 %411
  %v414 = vlaneseq
  %v415 = vshrl.u32 %v414, 7
  %v416 = vsub.s32 0, %v415
  %v417 = vrot.slane %v169, %v416
  %v418 = vmul.f32 %v412, %v417
  %v419 = vadd.f32 %v409, %v418
  %420 = vset.pattern.permute.xlu0 25
  %421 = vperm.xlu0 %420, %v25
  %v422 = vpop.permute.xlu0 %421
  %v424 = vlaneseq
  %v425 = vshrl.u32 %v424, 7
  %v426 = vsub.s32 1, %v425
  %v427 = vrot.slane %v169, %v426
  %v428 = vmul.f32 %v422, %v427
  %v429 = vadd.f32 %v419, %v428
  %430 = vset.pattern.permute.xlu0 26
  %431 = vperm.xlu0 %430, %v25
  %v432 = vpop.permute.xlu0 %431
  %v434 = vlaneseq
  %v435 = vshrl.u32 %v434, 7
  %v436 = vsub.s32 2, %v435
  %v437 = vrot.slane %v169, %v436
  %v438 = vmul.f32 %v432, %v437
  %v439 = vadd.f32 %v429, %v438
  %440 = vset.pattern.permute.xlu0 27
  %441 = vperm.xlu0 %440, %v25
  %v442 = vpop.permute.xlu0 %441
  %v444 = vlaneseq
  %v445 = vshrl.u32 %v444, 7
  %v446 = vsub.s32 3, %v445
  %v447 = vrot.slane %v169, %v446
  %v448 = vmul.f32 %v442, %v447
  %v449 = vadd.f32 %v439, %v448
  %450 = vset.pattern.permute.xlu0 28
  %451 = vperm.xlu0 %450, %v25
  %v452 = vpop.permute.xlu0 %451
  %v454 = vlaneseq
  %v455 = vshrl.u32 %v454, 7
  %v456 = vsub.s32 4, %v455
  %v457 = vrot.slane %v169, %v456
  %v458 = vmul.f32 %v452, %v457
  %v459 = vadd.f32 %v449, %v458
  %460 = vset.pattern.permute.xlu0 29
  %461 = vperm.xlu0 %460, %v25
  %v462 = vpop.permute.xlu0 %461
  %v464 = vlaneseq
  %v465 = vshrl.u32 %v464, 7
  %v466 = vsub.s32 5, %v465
  %v467 = vrot.slane %v169, %v466
  %v468 = vmul.f32 %v462, %v467
  %v469 = vadd.f32 %v459, %v468
  %470 = vset.pattern.permute.xlu0 30
  %471 = vperm.xlu0 %470, %v25
  %v472 = vpop.permute.xlu0 %471
  %v474 = vlaneseq
  %v475 = vshrl.u32 %v474, 7
  %v476 = vsub.s32 6, %v475
  %v477 = vrot.slane %v169, %v476
  %v478 = vmul.f32 %v472, %v477
  %v479 = vadd.f32 %v469, %v478
  %480 = vset.pattern.permute.xlu0 31
  %481 = vperm.xlu0 %480, %v25
  %v482 = vpop.permute.xlu0 %481
  %v484 = vlaneseq
  %v485 = vshrl.u32 %v484, 7
  %v486 = vsub.s32 7, %v485
  %v487 = vrot.slane %v169, %v486
  %v488 = vmul.f32 %v482, %v487
  %v489 = vadd.f32 %v479, %v488
  %v490 = vld [vmem:[%s4] sm:$0xf]
  %492 = vset.pattern.permute.xlu0 0
  %493 = vperm.xlu0 %492, %v490
  %v494 = vpop.permute.xlu0 %493
  %v496 = vadd.f32 %v489, %v494
  %vm497 = vcmask 11264
  %v498 = vsel %vm497, %v496, -inf
  %v499 = vrot.slane %v498, 4
  %v500 = vmax.f32 %v498, %v499
  %v501 = vrot.slane %v500, 2
  %v502 = vmax.f32 %v500, %v501
  %v503 = vrot.slane %v502, 1
  %v504 = vmax.f32 %v502, %v503
  %v505 = vsub.f32 %v496, %v504
  %v506 = vmul.f32 %v505, 1.442695
  %v507 = vpow.pop %v506
  %v508 = vsel %vm497, %v507, 0.0
  %v509 = vrot.slane %v508, 4
  %v510 = vadd.f32 %v508, %v509
  %v511 = vrot.slane %v510, 2
  %v512 = vadd.f32 %v510, %v511
  %v513 = vrot.slane %v512, 1
  %v514 = vadd.f32 %v512, %v513
  %v515 = vrcp.pop %v514
  %v516 = vmul.f32 %v507, %v515
  %517 = vst.msk [vmem:[%s5] sm:$0xf] %vm497, %v516
  // Predicated region
  $region22: #{tpu_custom_call.1} parent=0 // pred_check
    _
  $region23: #{tpu_custom_call.1} parent=0 // pred_check_branch
    %519 = sbr.rel (0) target = $region25
  $region24: #{tpu_custom_call.1} parent=0 // pred_region
    _
  $region25: #{tpu_custom_call.1} parent=0 // pred_fallthru
    _
  // Predicated region
  $region26: #{tpu_custom_call.1} parent=0 // pred_check
    _
  $region27: #{tpu_custom_call.1} parent=0 // pred_check_branch
    %521 = sbr.rel (0) target = $region29
  $region28: #{tpu_custom_call.1} parent=0 // pred_region
    _
  $region29: #{tpu_custom_call.1} parent=0 // pred_fallthru
    _

</llo_original>
